<compile_context>
chip_gen: v7x
topology: tpu7x:2x2x1
jax: 0.10.0
libtpu: 0.0.40
codegen_flags: <defaults>
</compile_context>

<pallas_src>
import jax
import jax.numpy as jnp
from jax.experimental import pallas as pl
from jax.experimental.pallas import tpu as pltpu


def _round_up(x, m):
    return ((x + m - 1) // m) * m


def routing_kernel(wt_ref, w1a_ref, w2_ref, b2_ref, o_ref):
    # wt_ref : (num_objs, TB)     f32 input tile, batch on the lane dim
    # w1a_ref: (H, num_objs + 1)  bf16, [W1[:, :num_objs] | b1] (b1 folded in)
    # w2_ref : (D, H)             bf16 output-layer weight (D = num_objs + 1)
    # b2_ref : (D, 1)             f32
    # o_ref  : (D, TB)            f32
    n, tb = wt_ref.shape
    wt = wt_ref[...]                                    # f32; reused for residual
    # Layer 1: fold b1 by appending a constant-1 activation row (K: n -> n+1).
    x = jnp.concatenate(
        [wt.astype(jnp.bfloat16), jnp.ones((1, tb), jnp.bfloat16)], axis=0)
    h = jnp.dot(w1a_ref[...], x, preferred_element_type=jnp.float32)
    h = jnp.maximum(h, 0.0).astype(jnp.bfloat16)        # ReLU, bf16 between layers
    # Layer 2 (+ b2 broadcast along lanes).
    y = jnp.dot(w2_ref[...], h, preferred_element_type=jnp.float32) + b2_ref[...]
    # Residual = w_ext = [w ; 0] built as a full (D, TB) tile -> one tanh and
    # one dense, unmasked store instead of two sublane-sliced streams.
    resid = jnp.concatenate([wt, jnp.zeros((1, tb), jnp.float32)], axis=0)
    o_ref[...] = jnp.tanh(y + resid)


def prepare_params(params, num_objs):
    """One-time parameter prep (hoisted out of the per-call path).

    - Drops the W1 column multiplying the appended zero feature.
    - Folds b1 into W1 (kernel appends a constant-1 activation row).
    - Casts matmul operands to bf16 (f32 accumulation stays in-kernel).
    """
    W1, b1, W2, b2 = params           # PyTorch layouts: (H, D), (H,), (D, H), (D,)
    H = W1.shape[0]
    D = W2.shape[0]
    w1a = jnp.concatenate(
        [jnp.asarray(W1, jnp.float32)[:, :num_objs],
         jnp.asarray(b1, jnp.float32).reshape(H, 1)],
        axis=1).astype(jnp.bfloat16)                       # (H, num_objs + 1)
    return (w1a,
            jnp.asarray(W2, jnp.bfloat16),                 # (D, H)
            jnp.asarray(b2, jnp.float32).reshape(D, 1))    # (D, 1)


def _pick_tile(B, tile_b):
    # Lane tiles must be multiples of 128.  Cap the tile so mid-sized batches
    # still split into >= 2 grid steps (lets v7x's 2 TensorCores share the
    # "parallel" batch axis); large batches just use tile_b.
    half = _round_up(pl.cdiv(B, 2), 128)
    return int(max(128, min(tile_b, half)))


def _streamed_spec(block_shape, index_map, num_tiles):
    # Deeper pipelining on the streamed operands when the grid is long; the
    # per-tile DMAs are small, so a third buffer hides issue latency cheaply.
    if num_tiles >= 3 and hasattr(pl, "Buffered"):
        try:
            return pl.BlockSpec(block_shape, index_map,
                                pipeline_mode=pl.Buffered(3))
        except TypeError:  # older jax: no pipeline_mode kwarg
            pass
    return pl.BlockSpec(block_shape, index_map)


def routing_net_forward_t(wt, prepped, *, tile_b=32768):
    """Transposed-layout entry point (no wrapper layout passes).

    wt: (num_objs, B) float32 with batch on the fast axis.
    Returns (num_objs + 1, B) float32.  Keep activations resident in this
    layout across calls to avoid all HBM transpose/pad traffic.
    """
    w1a, w2, b2_col = prepped
    num_objs, B = wt.shape
    H = w1a.shape[0]
    D = w2.shape[0]

    tb = _pick_tile(B, tile_b)
    num_tiles = pl.cdiv(B, tb)        # ragged last block handled by Pallas

    return pl.pallas_call(
        routing_kernel,
        out_shape=jax.ShapeDtypeStruct((D, B), jnp.float32),
        grid_spec=pltpu.PrefetchScalarGridSpec(
            num_scalar_prefetch=0,
            grid=(num_tiles,),
            in_specs=[
                _streamed_spec((num_objs, tb), lambda i: (0, i), num_tiles),
                pl.BlockSpec((H, num_objs + 1), lambda i: (0, 0)),  # W1|b1 (VMEM-resident)
                pl.BlockSpec((D, H), lambda i: (0, 0)),             # W2   (VMEM-resident)
                pl.BlockSpec((D, 1), lambda i: (0, 0)),             # b2   (VMEM-resident)
            ],
            out_specs=_streamed_spec((D, tb), lambda i: (0, i), num_tiles),
        ),
        compiler_params=pltpu.CompilerParams(
            dimension_semantics=("parallel",),   # v7x: shard batch tiles over 2 TCs
            vmem_limit_bytes=48 * 1024 * 1024),
    )(wt, w1a, w2, b2_col)


def routing_net_forward(w, prepped, *, tile_b=32768):
    """PyTorch-layout convenience shim: (B, num_objs) -> (B, num_objs + 1).

    Prefer routing_net_forward_t with activations kept in (features, B) layout;
    this shim adds two transpose passes purely for API parity with the module.
    """
    return routing_net_forward_t(w.T, prepped, tile_b=tile_b).T


def init_params(key, num_objs, hidden_dim):
    """Deterministic init matching nn.Linear shapes (uniform +-1/sqrt(fan_in))."""
    D = num_objs + 1
    k1, k2, k3, k4 = jax.random.split(key, 4)
    lim1 = 1.0 / (D ** 0.5)
    lim2 = 1.0 / (hidden_dim ** 0.5)
    W1 = jax.random.uniform(k1, (hidden_dim, D), jnp.float32, -lim1, lim1)
    b1 = jax.random.uniform(k2, (hidden_dim,), jnp.float32, -lim1, lim1)
    W2 = jax.random.uniform(k3, (D, hidden_dim), jnp.float32, -lim2, lim2)
    b2 = jax.random.uniform(k4, (D,), jnp.float32, -lim2, lim2)
    return W1, b1, W2, b2


if __name__ == "__main__":
    num_objs = 3       # -> feature dim num_objs + 1 = 4
    hidden_dim = 32
    batch = 8

    key = jax.random.PRNGKey(0)
    pkey, xkey = jax.random.split(key)
    params = init_params(pkey, num_objs, hidden_dim)
    prepped = prepare_params(params, num_objs)        # once, outside the hot path
    w = jax.random.uniform(xkey, (batch, num_objs), jnp.float32)

    fwd = jax.jit(routing_net_forward)
    out = jax.block_until_ready(fwd(w, prepped))

    # Plain-JAX f32 reference (exact PyTorch semantics incl. zero column + residual).
    W1, b1, W2, b2 = params
    w_ext = jnp.concatenate([w, jnp.zeros((batch, 1), jnp.float32)], axis=1)
    ref = jnp.tanh(jnp.maximum(w_ext @ W1.T + b1, 0.0) @ W2.T + b2 + w_ext)

    assert out.shape == (batch, num_objs + 1)
    # bf16 matmul operands (f32 accumulation) => ~1e-3 abs error vs f32 ref,
    # acceptable for this tanh-bounded routing head (documented trade-off).
    err = float(jnp.max(jnp.abs(out - ref)))
    assert jnp.allclose(out, ref, atol=1e-2, rtol=1e-2), err

    print("KERNEL_OK")
</pallas_src>

<mosaic_0001>
module attributes {stable_mosaic.version = 11 : i64} {
  func.func @routing_kernel(%arg0: i32, %arg1: memref<3x128xf32, #tpu.memory_space<vmem>>, %arg2: memref<32x4xbf16, #tpu.memory_space<vmem>>, %arg3: memref<4x32xbf16, #tpu.memory_space<vmem>>, %arg4: memref<4x1xf32, #tpu.memory_space<vmem>>, %arg5: memref<4x128xf32, #tpu.memory_space<vmem>>) attributes {dimension_semantics = [#tpu.dimension_semantics<parallel>], iteration_bounds = array<i64: 1>, scalar_prefetch = 0 : i64, scratch_operands = 0 : i64, tpu.core_type = #tpu.core_type<tc>, window_params = [{transform_indices = @transform_0, window_bounds = array<i64: 3, 128>}, {pipeline_mode = #tpu.pipeline_mode<synchronous>, transform_indices = @transform_1, window_bounds = array<i64: 32, 4>}, {pipeline_mode = #tpu.pipeline_mode<synchronous>, transform_indices = @transform_2, window_bounds = array<i64: 4, 32>}, {pipeline_mode = #tpu.pipeline_mode<synchronous>, transform_indices = @transform_3, window_bounds = array<i64: 4, 1>}, {transform_indices = @transform_4, window_bounds = array<i64: 4, 128>}]} {
    %c0 = arith.constant 0 : index
    %c0_0 = arith.constant 0 : index
    %0 = vector.load %arg1[%c0, %c0_0] : memref<3x128xf32, #tpu.memory_space<vmem>>, vector<3x128xf32>
    %1 = arith.truncf %0 : vector<3x128xf32> to vector<3x128xbf16>
    %cst = arith.constant 1.000000e+00 : bf16
    %2 = vector.broadcast %cst : bf16 to vector<1x128xbf16>
    %3 = tpu.concatenate %1, %2 in 0 : vector<3x128xbf16>, vector<1x128xbf16> -> vector<4x128xbf16>
    %c0_1 = arith.constant 0 : index
    %c0_2 = arith.constant 0 : index
    %4 = vector.load %arg2[%c0_1, %c0_2] : memref<32x4xbf16, #tpu.memory_space<vmem>>, vector<32x4xbf16>
    %cst_3 = arith.constant dense<0.000000e+00> : vector<32x128xf32>
    %5 = tpu.matmul %4, %3, %cst_3 {dimension_numbers = #tpu.dot_dimension_numbers<[1], [0], [0], [1], [0, 0, 1, 1], [], []>} : vector<32x4xbf16>, vector<4x128xbf16>, vector<32x128xf32> -> vector<32x128xf32>
    %cst_4 = arith.constant 0.000000e+00 : f32
    %6 = vector.broadcast %cst_4 : f32 to vector<32x128xf32>
    %7 = arith.maximumf %5, %6 : vector<32x128xf32>
    %8 = arith.truncf %7 : vector<32x128xf32> to vector<32x128xbf16>
    %c0_5 = arith.constant 0 : index
    %c0_6 = arith.constant 0 : index
    %9 = vector.load %arg3[%c0_5, %c0_6] : memref<4x32xbf16, #tpu.memory_space<vmem>>, vector<4x32xbf16>
    %cst_7 = arith.constant dense<0.000000e+00> : vector<4x128xf32>
    %10 = tpu.matmul %9, %8, %cst_7 {dimension_numbers = #tpu.dot_dimension_numbers<[1], [0], [0], [1], [0, 0, 1, 1], [], []>} : vector<4x32xbf16>, vector<32x128xbf16>, vector<4x128xf32> -> vector<4x128xf32>
    %c0_8 = arith.constant 0 : index
    %c0_9 = arith.constant 0 : index
    %11 = vector.load %arg4[%c0_8, %c0_9] : memref<4x1xf32, #tpu.memory_space<vmem>>, vector<4x1xf32>
    %12 = vector.broadcast %11 : vector<4x1xf32> to vector<4x128xf32>
    %13 = arith.addf %10, %12 : vector<4x128xf32>
    %cst_10 = arith.constant 0.000000e+00 : f32
    %14 = vector.broadcast %cst_10 : f32 to vector<1x128xf32>
    %15 = tpu.concatenate %0, %14 in 0 : vector<3x128xf32>, vector<1x128xf32> -> vector<4x128xf32>
    %16 = arith.addf %13, %15 : vector<4x128xf32>
    %17 = math.tanh %16 : vector<4x128xf32>
    %c0_11 = arith.constant 0 : index
    %c0_12 = arith.constant 0 : index
    %18 = vector.load %arg5[%c0_11, %c0_12] : memref<4x128xf32, #tpu.memory_space<vmem>>, vector<4x128xf32>
    tpu.vector_store %arg5[%c0_11, %c0_12], %17 {strides = array<i32>} : memref<4x128xf32, #tpu.memory_space<vmem>>, vector<4x128xf32>,
    return
  }
  func.func @transform_0(%arg0: i32) -> (i32, i32) {
    %c0_i32 = arith.constant 0 : i32
    %c0_i32_0 = arith.constant 0 : i32
    return %c0_i32, %arg0 : i32, i32
  }
  func.func @transform_1(%arg0: i32) -> (i32, i32) {
    %c0_i32 = arith.constant 0 : i32
    %c0_i32_0 = arith.constant 0 : i32
    %c0_i32_1 = arith.constant 0 : i32
    return %c0_i32, %c0_i32_0 : i32, i32
  }
  func.func @transform_2(%arg0: i32) -> (i32, i32) {
    %c0_i32 = arith.constant 0 : i32
    %c0_i32_0 = arith.constant 0 : i32
    %c0_i32_1 = arith.constant 0 : i32
    return %c0_i32, %c0_i32_0 : i32, i32
  }
  func.func @transform_3(%arg0: i32) -> (i32, i32) {
    %c0_i32 = arith.constant 0 : i32
    %c0_i32_0 = arith.constant 0 : i32
    %c0_i32_1 = arith.constant 0 : i32
    return %c0_i32, %c0_i32_0 : i32, i32
  }
  func.func @transform_4(%arg0: i32) -> (i32, i32) {
    %c0_i32 = arith.constant 0 : i32
    %c0_i32_0 = arith.constant 0 : i32
    return %c0_i32, %arg0 : i32, i32
  }
}

</mosaic_0001>

<llo_original>
// kernel: routing_net_forward.1
$region0: #{routing_net_forward.1}
  #allocation0 [shape = 'u32[]', space=smem, size = 0x4, offset = 0x4, fixed_abs, tag = 'smem constant byte address 0x4 - core index']
  #allocation1 [shape = 'u32[144,128]{1,0:T(1,128)}', space=vmem, size = 0x12000, scoped, tag = 'internal scratch']
  %s0 = inlined_call_operand.vmem [shape: f32[3,8], index: 0, kind: input, shape index: {}]
  %s1 = inlined_call_operand.vmem [shape: bf16[32,4], index: 1, kind: input, shape index: {}]
  %s2 = inlined_call_operand.vmem [shape: bf16[4,32], index: 2, kind: input, shape index: {}]
  %s3 = inlined_call_operand.vmem [shape: f32[4,1], index: 3, kind: input, shape index: {}]
  %s4 = inlined_call_operand.hbm [shape: f32[4,8], index: 4, kind: output, shape index: {}]
  %s5 = sld [smem:[#allocation0]]
  $region26: #{routing_net_forward.1} parent=0
    _
  %s7 = ssub.s32 1, %s5
  %s8 = scalar_select 0, %s7, %s5
  $region1: #{routing_net_forward.1} parent=0
    #allocation2 [shape = 'u8[2048]{0}', space=vmem, size = 0x800, scoped, tag = 'output window, operand 0, single buffered']
    #allocation3 [shape = 's32[1]{0}', space=sflag, size = 0x4, scoped, tag = 'scoped memory for routing_net_forward.1']
    %9 = vsyncpa [#allocation3], 0
    // Predicated region
    $region2: #{routing_net_forward.1} parent=1 // pred_check
      _
    $region3: #{routing_net_forward.1} parent=1 // pred_check_branch
      %11 = sbr.rel (0) target = $region5
    $region4: #{routing_net_forward.1} parent=1 // pred_region
      _
    $region5: #{routing_net_forward.1} parent=1 // pred_fallthru
      _
    // Predicated region
    $region6: #{routing_net_forward.1} parent=1 // pred_check
      _
    $region7: #{routing_net_forward.1} parent=1 // pred_check_branch
      %13 = sbr.rel (0) target = $region9
    $region8: #{routing_net_forward.1} parent=1 // pred_region
      _
    $region9: #{routing_net_forward.1} parent=1 // pred_fallthru
      _
    // Predicated region
    $region10: #{routing_net_forward.1} parent=1 // pred_check
      _
    $region11: #{routing_net_forward.1} parent=1 // pred_check_branch
      %15 = sbr.rel (0) target = $region13
    $region12: #{routing_net_forward.1} parent=1 // pred_region
      _
    $region13: #{routing_net_forward.1} parent=1 // pred_fallthru
      _
    // Predicated region
    $region14: #{routing_net_forward.1} parent=1 // pred_check
      _
    $region15: #{routing_net_forward.1} parent=1 // pred_check_branch
      %17 = sbr.rel (0) target = $region17
    $region16: #{routing_net_forward.1} parent=1 // pred_region
      _
    $region17: #{routing_net_forward.1} parent=1 // pred_fallthru
      _
    %v20 = vld [vmem:[%s0] sm:$0x7]
    %v21 = vpack.c.bf16 %v20, %v20
    %vm22 = vcmask 1041408
    %vm23 = vsmask.f32 1280
    %vm24 = vmand %vm22, %vm23
    %v25 = vsel %vm24, %v21, 1065369472
    %v26 = vld [vmem:[%s1] sm:$0xf]
    %v27 = vld [vmem:[%s1 + $0x4] sm:$0xf]
    %v28 = vld [vmem:[%s1 + $0x8] sm:$0xf]
    %v29 = vld [vmem:[%s1 + $0xc] sm:$0xf]
    %v34 = vunpack.c.l.b16 %v26
    %v35 = vunpack.c.l.b16 %v27
    %v36 = vunpack.c.l.b16 %v28
    %v37 = vunpack.c.l.b16 %v29
    %v38 = vpack.c.b16 %v35, %v34
    %v39 = vpack.c.b16 %v37, %v36
    %vm40 = vcmask 31744
    %v42 = vsel %vm40, %v38, 0
    %v45 = vsel %vm40, %v39, 0
    %vm47 = vcmask 1041408
    %v49 = vsel %vm47, %v25, 0
    %51 = vmatprep.subr.bf16.mxu0 0
    %52 = vmatpush1.bf16.msra.mxu0 %v49
    %53 = vmatprep.subr.bf16.mxu0 0
    %54 = vmatpush1.bf16.msra.mxu0 0
    %55 = vmatprep.subr.bf16.mxu0 0
    %56 = vmatpush1.bf16.msra.mxu0 0
    %57 = vmatprep.subr.bf16.mxu0 0
    %58 = vmatpush1.bf16.msra.mxu0 0
    %59 = vmatprep.subr.bf16.mxu0 0
    %60 = vmatpush1.bf16.msra.mxu0 0
    %61 = vmatprep.subr.bf16.mxu0 0
    %62 = vmatpush1.bf16.msra.mxu0 0
    %63 = vmatprep.subr.bf16.mxu0 0
    %64 = vmatpush1.bf16.msra.mxu0 0
    %65 = vmatprep.subr.bf16.mxu0 0
    %66 = vmatpush1.bf16.msra.mxu0 0
    %67 = vmatprep.subr.bf16.mxu0 0
    %68 = vmatpush1.bf16.msra.mxu0 0
    %69 = vmatprep.subr.bf16.mxu0 0
    %70 = vmatpush1.bf16.msra.mxu0 0
    %71 = vmatprep.subr.bf16.mxu0 0
    %72 = vmatpush1.bf16.msra.mxu0 0
    %73 = vmatprep.subr.bf16.mxu0 0
    %74 = vmatpush1.bf16.msra.mxu0 0
    %75 = vmatprep.subr.bf16.mxu0 0
    %76 = vmatpush1.bf16.msra.mxu0 0
    %77 = vmatprep.subr.bf16.mxu0 0
    %78 = vmatpush1.bf16.msra.mxu0 0
    %79 = vmatprep.subr.bf16.mxu0 0
    %80 = vmatpush1.bf16.msra.mxu0 0
    %81 = vmatprep.subr.bf16.mxu0 0
    %82 = vmatpush1.bf16.msra.mxu0 0
    %83 = vmatprep.mubr.bf16.mxu0 0
    %84 = vmatmul.mubr.bf16.gmra.mrb[0].mxu0 %v42
    %v85 = vpop.f32.mrb[0].mxu0
    %v86 = vadd.f32 0.0, %v85
    %v87 = vpop.f32.mrb[0].mxu0
    %v88 = vpop.f32.mrb[0].mxu0
    %v89 = vadd.f32 0.0, %v88
    %v90 = vpop.f32.mrb[0].mxu0
    %91 = vmatprep.mubr.bf16.mxu0 0
    %92 = vmatmul.mubr.bf16.gmra.mrb[0].mxu0 %v45
    %v93 = vpop.f32.mrb[0].mxu0
    %v94 = vadd.f32 0.0, %v93
    %v95 = vpop.f32.mrb[0].mxu0
    %v96 = vpop.f32.mrb[0].mxu0
    %v97 = vadd.f32 0.0, %v96
    %v98 = vpop.f32.mrb[0].mxu0
    %99 = vdwg.mxu0
    %v100 = vmax.f32 %v86, 0.0
    %v101 = vmax.f32 %v89, 0.0
    %v102 = vmax.f32 %v94, 0.0
    %v103 = vmax.f32 %v97, 0.0
    %v104 = vpack.c.bf16 %v101, %v100
    %v105 = vpack.c.bf16 %v103, %v102
    %v106 = vld [vmem:[%s2] sm:$0x3]
    %v107 = vld [vmem:[%s3] sm:$0xf]
    %109 = vset.pattern.permute.xlu0 0
    %110 = vperm.xlu0 %109, %v107
    %v111 = vpop.permute.xlu0 %110
    %vm113 = vcmask 261120
    %v115 = vsel %vm113, %v106, 0
    %117 = vmatprep.subr.bf16.mxu0 0
    %118 = vmatpush1.bf16.msra.mxu0 %v104
    %119 = vmatprep.subr.bf16.mxu0 0
    %120 = vmatpush1.bf16.msra.mxu0 %v105
    %121 = vmatprep.subr.bf16.mxu0 0
    %122 = vmatpush1.bf16.msra.mxu0 0
    %123 = vmatprep.subr.bf16.mxu0 0
    %124 = vmatpush1.bf16.msra.mxu0 0
    %125 = vmatprep.subr.bf16.mxu0 0
    %126 = vmatpush1.bf16.msra.mxu0 0
    %127 = vmatprep.subr.bf16.mxu0 0
    %128 = vmatpush1.bf16.msra.mxu0 0
    %129 = vmatprep.subr.bf16.mxu0 0
    %130 = vmatpush1.bf16.msra.mxu0 0
    %131 = vmatprep.subr.bf16.mxu0 0
    %132 = vmatpush1.bf16.msra.mxu0 0
    %133 = vmatprep.subr.bf16.mxu0 0
    %134 = vmatpush1.bf16.msra.mxu0 0
    %135 = vmatprep.subr.bf16.mxu0 0
    %136 = vmatpush1.bf16.msra.mxu0 0
    %137 = vmatprep.subr.bf16.mxu0 0
    %138 = vmatpush1.bf16.msra.mxu0 0
    %139 = vmatprep.subr.bf16.mxu0 0
    %140 = vmatpush1.bf16.msra.mxu0 0
    %141 = vmatprep.subr.bf16.mxu0 0
    %142 = vmatpush1.bf16.msra.mxu0 0
    %143 = vmatprep.subr.bf16.mxu0 0
    %144 = vmatpush1.bf16.msra.mxu0 0
    %145 = vmatprep.subr.bf16.mxu0 0
    %146 = vmatpush1.bf16.msra.mxu0 0
    %147 = vmatprep.subr.bf16.mxu0 0
    %148 = vmatpush1.bf16.msra.mxu0 0
    %149 = vmatprep.mubr.bf16.mxu0 0
    %150 = vmatmul.mubr.bf16.gmra.mrb[0].mxu0 %v115
    %v151 = vpop.f32.mrb[0].mxu0
    %v152 = vadd.f32 %v111, %v151
    %v153 = vpop.f32.mrb[0].mxu0
    %v154 = vpop.f32.mrb[0].mxu0
    %v155 = vpop.f32.mrb[0].mxu0
    %156 = vdwg.mxu0
    %vm157 = vcmask 1042432
    %v158 = vsel %vm157, %v20, 0.0
    %v159 = vadd.f32 %v152, %v158
    %v160 = vtanh.pop %v159
    %161 = vst [vmem:[#allocation2] sm:$0xf] %v160
    // Predicated region
    $region18: #{routing_net_forward.1} parent=1 // pred_check
      _
    $region19: #{routing_net_forward.1} parent=1 // pred_check_branch
      %163 = sbr.rel (0) target = $region21
    $region20: #{routing_net_forward.1} parent=1 // pred_region
      %s165 = ssub.s32 64, 64
      %166 = vsyncadd [#allocation3], %s165
      %s168 = sshll.u32 [#allocation2], 4
      %s169 = int_to_ptr.vmem [resolvable:$true] %s168
      %171 = dma.vmem_to_hbm [thread:$0]  %s169, 64, %s4, [#allocation3]
    $region21: #{routing_net_forward.1} parent=1 // pred_fallthru
      _
    // Predicated region
    $region22: #{routing_net_forward.1} parent=1 // pred_check
      _
    $region23: #{routing_net_forward.1} parent=1 // pred_check_branch
      %173 = sbr.rel (0) target = $region25
    $region24: #{routing_net_forward.1} parent=1 // pred_region
      %174 = dma.done [#allocation3], 64
    $region25: #{routing_net_forward.1} parent=1 // pred_fallthru
      _
    %175 = vsyncpa [#allocation3], 1

</llo_original>
